<compile_context>
chip_gen: v7x
topology: tpu7x:2x2x1
jax: 0.10.0
libtpu: 0.0.40
codegen_flags: <defaults>
</compile_context>

<pallas_src>
import functools

import jax
import jax.numpy as jnp
from jax.experimental import pallas as pl
from jax.experimental.pallas import tpu as pltpu

HIDDEN = 64
FUSED = 2 * HIDDEN          # 128 = actor(64) | critic(64) fused width
TEMPERATURE = 1.0           # Agent.temperature


def _round_up(x, m):
    return ((x + m - 1) // m) * m


# ----------------------------------------------------------------------------
# Kernel
# ----------------------------------------------------------------------------
def _agent_kernel(x_ref, w_ref, out_ref, *, op, a, temperature):
    """x_ref: [TB, op] f32; w_ref: packed blob [op+256+8, 128]; out_ref: [TB, 256].

    Blob layout (all rows 128 lanes wide):
      [0      : op    ]  W1 fused  (cols 0:64 actor, 64:128 critic; rows >= obs are 0)
      [op     : op+128]  W2 fused  (block diagonal)
      [op+128 : op+256]  W3 fused  (rows 0:64 -> cols 0:A = actor W3; rows 64:128 -> col A = critic W3)
      [op+256]           b1 fused
      [op+257]           b2 fused
      [op+258]           b3 fused  (lanes 0:A actor bias, lane A critic bias, rest 0)
    """
    x = x_ref[...]                                   # [TB, op]

    w1 = w_ref[0:op, :]                              # [op, 128]
    w2 = w_ref[op:op + FUSED, :]                     # [128, 128]
    w3 = w_ref[op + FUSED:op + 2 * FUSED, :]         # [128, 128]
    b1 = w_ref[op + 2 * FUSED + 0:op + 2 * FUSED + 1, :]   # [1, 128]
    b2 = w_ref[op + 2 * FUSED + 1:op + 2 * FUSED + 2, :]
    b3 = w_ref[op + 2 * FUSED + 2:op + 2 * FUSED + 3, :]

    # Fused actor|critic MLP: three 128-wide matmuls.
    h = jnp.tanh(jnp.dot(x, w1, preferred_element_type=jnp.float32) + b1)
    h = jnp.tanh(jnp.dot(h, w2, preferred_element_type=jnp.float32) + b2)
    y3 = jnp.dot(h, w3, preferred_element_type=jnp.float32) + b3       # [TB, 128]
    # y3 lanes: [0:a] = policy logits, [a] = value, [a+1:128] = 0.

    # Masked log-softmax over the first `a` lanes (Categorical(logits / T)).
    tb = y3.shape[0]
    lane = jax.lax.broadcasted_iota(jnp.int32, (tb, FUSED), 1)
    valid = lane < a
    if temperature != 1.0:                       # statically elided when T == 1
        scaled = y3 * jnp.float32(1.0 / temperature)
    else:
        scaled = y3
    m = jnp.max(jnp.where(valid, scaled, -jnp.inf), axis=-1, keepdims=True)
    e = jnp.where(valid, jnp.exp(scaled - m), 0.0)
    s = jnp.sum(e, axis=-1, keepdims=True)
    logp = (scaled - m) - jnp.log(s)             # valid only in lanes [0:a]

    # Lane-dense stores: both at 128-aligned lane offsets -> unmasked vst.
    out_ref[:, 0:FUSED] = y3
    out_ref[:, FUSED:2 * FUSED] = logp


# ----------------------------------------------------------------------------
# Wrapper
# ----------------------------------------------------------------------------
@functools.partial(jax.jit, static_argnames=("action_space",))
def agent_forward(x, wblob, *, action_space):
    """Returns (log_probs [B,A], value [B,1], policy_logits [B,A])."""
    B, obs = x.shape
    A = action_space
    OP = _round_up(obs, 8)

    # Batch tiling: whole (8-padded) batch for small B, 512-row tiles otherwise.
    TILE_B = 512 if B >= 512 else _round_up(B, 8)
    B_pad = _round_up(B, TILE_B)

    xp = x.astype(jnp.float32)
    if (B_pad != B) or (OP != obs):
        xp = jnp.pad(xp, ((0, B_pad - B), (0, OP - obs)))

    P = wblob.shape[0]                       # OP + 2*FUSED + 8
    kernel = functools.partial(_agent_kernel, op=OP, a=A, temperature=TEMPERATURE)

    cost = pl.CostEstimate(
        flops=2 * B_pad * (OP * FUSED + FUSED * FUSED + FUSED * FUSED),
        transcendentals=3 * B_pad * FUSED,            # 2x tanh + exp
        bytes_accessed=xp.size * 4 + wblob.size * 4 + B_pad * 2 * FUSED * 4,
    )

    out = pl.pallas_call(
        kernel,
        out_shape=jax.ShapeDtypeStruct((B_pad, 2 * FUSED), jnp.float32),
        grid_spec=pltpu.PrefetchScalarGridSpec(
            num_scalar_prefetch=0,
            grid=(B_pad // TILE_B,),
            in_specs=[
                pl.BlockSpec((TILE_B, OP), lambda i: (i, 0)),     # x tile
                pl.BlockSpec((P, FUSED), lambda i: (0, 0)),       # packed weights (resident)
            ],
            out_specs=pl.BlockSpec((TILE_B, 2 * FUSED), lambda i: (i, 0)),
        ),
        compiler_params=pltpu.CompilerParams(
            dimension_semantics=("parallel",),        # megacore-shard batch on v7x
            vmem_limit_bytes=32 * 1024 * 1024,        # safe on v5e/v6e/v7x
        ),
        cost_estimate=cost,
    )(xp, wblob)

    logits = out[:B, :A]
    value = out[:B, A:A + 1]
    logp = out[:B, FUSED:FUSED + A]
    return logp, value, logits


# ----------------------------------------------------------------------------
# Parameter init / packing (host-side, done once)
# ----------------------------------------------------------------------------
def _orthogonal(key, shape, gain):
    """Deterministic orthogonal init (matches torch.nn.init.orthogonal_ semantics)."""
    rows, cols = shape
    n = max(rows, cols)
    a = jax.random.normal(key, (n, n), dtype=jnp.float32)
    q, r = jnp.linalg.qr(a)
    d = jnp.diag(r)
    q = q * jnp.where(d >= 0, 1.0, -1.0)     # robust sign (no zeroed columns)
    return gain * q[:rows, :cols]


def init_agent_params(key, obs_space, action_space):
    gain = float(jnp.sqrt(2.0))
    keys = jax.random.split(key, 6)
    # weights stored [in, out]; orthogonal_ applied to torch's [out, in] then transposed.
    return {
        "aw1": _orthogonal(keys[0], (HIDDEN, obs_space), gain).T,
        "ab1": jnp.zeros((HIDDEN,), jnp.float32),
        "aw2": _orthogonal(keys[1], (HIDDEN, HIDDEN), gain).T,
        "ab2": jnp.zeros((HIDDEN,), jnp.float32),
        "aw3": _orthogonal(keys[2], (action_space, HIDDEN), gain).T,
        "ab3": jnp.zeros((action_space,), jnp.float32),
        "cw1": _orthogonal(keys[3], (HIDDEN, obs_space), gain).T,
        "cb1": jnp.zeros((HIDDEN,), jnp.float32),
        "cw2": _orthogonal(keys[4], (HIDDEN, HIDDEN), gain).T,
        "cb2": jnp.zeros((HIDDEN,), jnp.float32),
        "cw3": _orthogonal(keys[5], (1, HIDDEN), gain).T,
        "cb3": jnp.zeros((1,), jnp.float32),
    }


def pack_agent_params(params, obs_space, action_space):
    """Pack actor+critic weights/biases into one lane-dense [OP+264, 128] f32 blob."""
    A = action_space
    assert A <= HIDDEN - 1, "slab layout requires action_space <= 63"
    OP = _round_up(obs_space, 8)
    f32 = jnp.float32

    w1f = jnp.zeros((OP, FUSED), f32)
    w1f = w1f.at[:obs_space, :HIDDEN].set(params["aw1"].astype(f32))
    w1f = w1f.at[:obs_space, HIDDEN:].set(params["cw1"].astype(f32))

    w2f = jnp.zeros((FUSED, FUSED), f32)                      # block diagonal
    w2f = w2f.at[:HIDDEN, :HIDDEN].set(params["aw2"].astype(f32))
    w2f = w2f.at[HIDDEN:, HIDDEN:].set(params["cw2"].astype(f32))

    w3f = jnp.zeros((FUSED, FUSED), f32)
    w3f = w3f.at[:HIDDEN, :A].set(params["aw3"].astype(f32))          # logits cols
    w3f = w3f.at[HIDDEN:, A:A + 1].set(params["cw3"].astype(f32))     # value col

    b1f = jnp.concatenate([params["ab1"], params["cb1"]]).astype(f32)
    b2f = jnp.concatenate([params["ab2"], params["cb2"]]).astype(f32)
    b3f = jnp.zeros((FUSED,), f32).at[:A].set(params["ab3"].astype(f32))
    b3f = b3f.at[A:A + 1].set(params["cb3"].astype(f32))

    bias_rows = jnp.zeros((8, FUSED), f32)
    bias_rows = bias_rows.at[0].set(b1f).at[1].set(b2f).at[2].set(b3f)

    return jnp.concatenate([w1f, w2f, w3f, bias_rows], axis=0)   # [OP+264, 128]


# ----------------------------------------------------------------------------
# Pure-JAX reference (unfused) for correctness checking
# ----------------------------------------------------------------------------
def _reference_forward(x, p):
    h = jnp.tanh(x @ p["aw1"] + p["ab1"])
    h = jnp.tanh(h @ p["aw2"] + p["ab2"])
    logits = h @ p["aw3"] + p["ab3"]
    logp = jax.nn.log_softmax(logits / TEMPERATURE, axis=-1)
    g = jnp.tanh(x @ p["cw1"] + p["cb1"])
    g = jnp.tanh(g @ p["cw2"] + p["cb2"])
    value = g @ p["cw3"] + p["cb3"]
    return logp, value, logits


if __name__ == "__main__":
    key = jax.random.PRNGKey(0)
    k_params, k_x = jax.random.split(key)

    batch, obs_space, action_space = 8, 16, 6
    params = init_agent_params(k_params, obs_space, action_space)
    wblob = pack_agent_params(params, obs_space, action_space)      # packed once
    x = jax.random.normal(k_x, (batch, obs_space), dtype=jnp.float32)

    logp, value, logits = agent_forward(x, wblob, action_space=action_space)
    jax.block_until_ready((logp, value, logits))

    # sanity check against pure-JAX reference
    ref_logp, ref_value, ref_logits = _reference_forward(x, params)
    assert jnp.allclose(logits, ref_logits, atol=1e-4, rtol=1e-4)
    assert jnp.allclose(logp, ref_logp, atol=1e-4, rtol=1e-4)
    assert jnp.allclose(value, ref_value, atol=1e-4, rtol=1e-4)

    print("KERNEL_OK")
</pallas_src>

<mosaic_0001>
module attributes {stable_mosaic.version = 11 : i64} {
  func.func @_agent_kernel(%arg0: i32, %arg1: memref<8x16xf32, #tpu.memory_space<vmem>>, %arg2: memref<280x128xf32, #tpu.memory_space<vmem>>, %arg3: memref<8x256xf32, #tpu.memory_space<vmem>>) attributes {dimension_semantics = [#tpu.dimension_semantics<parallel>], iteration_bounds = array<i64: 1>, scalar_prefetch = 0 : i64, scratch_operands = 0 : i64, tpu.core_type = #tpu.core_type<tc>, window_params = [{transform_indices = @transform_0, window_bounds = array<i64: 8, 16>}, {pipeline_mode = #tpu.pipeline_mode<synchronous>, transform_indices = @transform_1, window_bounds = array<i64: 280, 128>}, {transform_indices = @transform_2, window_bounds = array<i64: 8, 256>}]} {
    %c0 = arith.constant 0 : index
    %c0_0 = arith.constant 0 : index
    %0 = vector.load %arg1[%c0, %c0_0] : memref<8x16xf32, #tpu.memory_space<vmem>>, vector<8x16xf32>
    %c0_1 = arith.constant 0 : index
    %c0_2 = arith.constant 0 : index
    %1 = vector.load %arg2[%c0_1, %c0_2] : memref<280x128xf32, #tpu.memory_space<vmem>>, vector<16x128xf32>
    %c16 = arith.constant 16 : index
    %c0_3 = arith.constant 0 : index
    %2 = vector.load %arg2[%c16, %c0_3] : memref<280x128xf32, #tpu.memory_space<vmem>>, vector<128x128xf32>
    %c144 = arith.constant 144 : index
    %c0_4 = arith.constant 0 : index
    %3 = vector.load %arg2[%c144, %c0_4] : memref<280x128xf32, #tpu.memory_space<vmem>>, vector<128x128xf32>
    %c272 = arith.constant 272 : index
    %c0_5 = arith.constant 0 : index
    %4 = vector.load %arg2[%c272, %c0_5] : memref<280x128xf32, #tpu.memory_space<vmem>>, vector<1x128xf32>
    %c273 = arith.constant 273 : index
    %c0_6 = arith.constant 0 : index
    %5 = vector.load %arg2[%c273, %c0_6] : memref<280x128xf32, #tpu.memory_space<vmem>>, vector<1x128xf32>
    %c274 = arith.constant 274 : index
    %c0_7 = arith.constant 0 : index
    %6 = vector.load %arg2[%c274, %c0_7] : memref<280x128xf32, #tpu.memory_space<vmem>>, vector<1x128xf32>
    %cst = arith.constant dense<0.000000e+00> : vector<8x128xf32>
    %7 = tpu.matmul %0, %1, %cst {dimension_numbers = #tpu.dot_dimension_numbers<[1], [0], [0], [1], [0, 0, 1, 1], [], []>} : vector<8x16xf32>, vector<16x128xf32>, vector<8x128xf32> -> vector<8x128xf32>
    %8 = vector.broadcast %4 : vector<1x128xf32> to vector<8x128xf32>
    %9 = arith.addf %7, %8 : vector<8x128xf32>
    %10 = math.tanh %9 : vector<8x128xf32>
    %cst_8 = arith.constant dense<0.000000e+00> : vector<8x128xf32>
    %11 = tpu.matmul %10, %2, %cst_8 {dimension_numbers = #tpu.dot_dimension_numbers<[1], [0], [0], [1], [0, 0, 1, 1], [], []>} : vector<8x128xf32>, vector<128x128xf32>, vector<8x128xf32> -> vector<8x128xf32>
    %12 = vector.broadcast %5 : vector<1x128xf32> to vector<8x128xf32>
    %13 = arith.addf %11, %12 : vector<8x128xf32>
    %14 = math.tanh %13 : vector<8x128xf32>
    %cst_9 = arith.constant dense<0.000000e+00> : vector<8x128xf32>
    %15 = tpu.matmul %14, %3, %cst_9 {dimension_numbers = #tpu.dot_dimension_numbers<[1], [0], [0], [1], [0, 0, 1, 1], [], []>} : vector<8x128xf32>, vector<128x128xf32>, vector<8x128xf32> -> vector<8x128xf32>
    %16 = vector.broadcast %6 : vector<1x128xf32> to vector<8x128xf32>
    %17 = arith.addf %15, %16 : vector<8x128xf32>
    %18 = tpu.iota {dimensions = array<i32: 1>} : vector<8x128xi32>
    %c6_i32 = arith.constant 6 : i32
    %19 = vector.broadcast %c6_i32 : i32 to vector<8x128xi32>
    %20 = arith.cmpi slt, %18, %19 : vector<8x128xi32>
    %cst_10 = arith.constant 0xFF800000 : f32
    %21 = vector.broadcast %cst_10 : f32 to vector<8x128xf32>
    %22 = arith.select %20, %17, %21 : vector<8x128xi1>, vector<8x128xf32>
    %cst_11 = arith.constant dense<0xFF800000> : vector<8xf32>
    %23 = vector.multi_reduction <maximumf>, %22, %cst_11 [1] : vector<8x128xf32> to vector<8xf32>
    %24 = vector.shape_cast %23 : vector<8xf32> to vector<8x1xf32>
    %25 = vector.broadcast %24 : vector<8x1xf32> to vector<8x128xf32>
    %26 = arith.subf %17, %25 : vector<8x128xf32>
    %27 = math.exp %26 : vector<8x128xf32>
    %cst_12 = arith.constant 0.000000e+00 : f32
    %28 = vector.broadcast %cst_12 : f32 to vector<8x128xf32>
    %29 = arith.select %20, %27, %28 : vector<8x128xi1>, vector<8x128xf32>
    %cst_13 = arith.constant dense<0.000000e+00> : vector<8xf32>
    %30 = vector.multi_reduction <add>, %29, %cst_13 [1] : vector<8x128xf32> to vector<8xf32>
    %31 = vector.shape_cast %30 : vector<8xf32> to vector<8x1xf32>
    %32 = vector.broadcast %24 : vector<8x1xf32> to vector<8x128xf32>
    %33 = arith.subf %17, %32 : vector<8x128xf32>
    %34 = math.log %31 : vector<8x1xf32>
    %35 = vector.broadcast %34 : vector<8x1xf32> to vector<8x128xf32>
    %36 = arith.subf %33, %35 : vector<8x128xf32>
    %c0_14 = arith.constant 0 : index
    %c0_15 = arith.constant 0 : index
    %37 = vector.load %arg3[%c0_14, %c0_15] : memref<8x256xf32, #tpu.memory_space<vmem>>, vector<8x128xf32>
    tpu.vector_store %arg3[%c0_14, %c0_15], %17 {strides = array<i32>} : memref<8x256xf32, #tpu.memory_space<vmem>>, vector<8x128xf32>,
    %c0_16 = arith.constant 0 : index
    %c128 = arith.constant 128 : index
    %38 = vector.load %arg3[%c0_16, %c128] : memref<8x256xf32, #tpu.memory_space<vmem>>, vector<8x128xf32>
    tpu.vector_store %arg3[%c0_16, %c128], %36 {strides = array<i32>} : memref<8x256xf32, #tpu.memory_space<vmem>>, vector<8x128xf32>,
    return
  }
  func.func @transform_0(%arg0: i32) -> (i32, i32) {
    %c0_i32 = arith.constant 0 : i32
    %c0_i32_0 = arith.constant 0 : i32
    return %arg0, %c0_i32 : i32, i32
  }
  func.func @transform_1(%arg0: i32) -> (i32, i32) {
    %c0_i32 = arith.constant 0 : i32
    %c0_i32_0 = arith.constant 0 : i32
    %c0_i32_1 = arith.constant 0 : i32
    return %c0_i32, %c0_i32_0 : i32, i32
  }
  func.func @transform_2(%arg0: i32) -> (i32, i32) {
    %c0_i32 = arith.constant 0 : i32
    %c0_i32_0 = arith.constant 0 : i32
    return %arg0, %c0_i32 : i32, i32
  }
}

</mosaic_0001>

<llo_original>
// kernel: agent_forward.1
$region0: #{agent_forward.1}
  #allocation0 [shape = 'u32[]', space=smem, size = 0x4, offset = 0x4, fixed_abs, tag = 'smem constant byte address 0x4 - core index']
  #allocation1 [shape = 'u32[144,128]{1,0:T(1,128)}', space=vmem, size = 0x12000, scoped, tag = 'internal scratch']
  %s0 = inlined_call_operand.hbm [shape: f32[8,16], index: 0, kind: input, shape index: {}]
  %s1 = inlined_call_operand.hbm [shape: f32[280,128], index: 1, kind: input, shape index: {}]
  %s2 = inlined_call_operand.vmem [shape: f32[8,256], index: 2, kind: output, shape index: {}]
  %s3 = sld [smem:[#allocation0]]
  $region26: #{agent_forward.1} parent=0
    _
  %s5 = ssub.s32 1, %s3
  %s6 = scalar_select 0, %s5, %s3
  $region1: #{agent_forward.1} parent=0
    #allocation2 [shape = 'u8[4096]{0}', space=vmem, size = 0x1000, scoped, tag = 'input window, operand 0, single buffered']
    #allocation3 [shape = 's32[1]{0}', space=sflag, size = 0x4, scoped, tag = 'scoped memory for agent_forward.1']
    #allocation4 [shape = 'u8[143360]{0}', space=vmem, size = 0x23000, scoped, tag = 'input window, operand 1, single buffered']
    #allocation5 [shape = 's32[1]{0}', space=sflag, size = 0x4, scoped, tag = 'scoped memory for agent_forward.1']
    %7 = vsyncpa [#allocation3], 0
    %8 = vsyncpa [#allocation5], 0
    // Predicated region
    $region2: #{agent_forward.1} parent=1 // pred_check
      _
    $region3: #{agent_forward.1} parent=1 // pred_check_branch
      %10 = sbr.rel (0) target = $region5
    $region4: #{agent_forward.1} parent=1 // pred_region
      %s12 = ssub.s32 128, 128
      %13 = vsyncadd [#allocation3], %s12
      %s15 = sshll.u32 [#allocation2], 4
      %s16 = int_to_ptr.vmem [resolvable:$true] %s15
      %18 = dma.hbm_to_vmem [thread:$0]  %s0, 128, %s16, [#allocation3]
    $region5: #{agent_forward.1} parent=1 // pred_fallthru
      _
    // Predicated region
    $region6: #{agent_forward.1} parent=1 // pred_check
      _
    $region7: #{agent_forward.1} parent=1 // pred_check_branch
      %20 = sbr.rel (0) target = $region9
    $region8: #{agent_forward.1} parent=1 // pred_region
      %s22 = ssub.s32 4480, 4480
      %23 = vsyncadd [#allocation5], %s22
      %s24 = sshll.u32 [#allocation4], 4
      %s25 = int_to_ptr.vmem [resolvable:$true] %s24
      %30 = dma.hbm_to_vmem [thread:$0]  %s1, 4480, %s25, [#allocation5], 128, 128, 8
    $region9: #{agent_forward.1} parent=1 // pred_fallthru
      _
    // Predicated region
    $region10: #{agent_forward.1} parent=1 // pred_check
      _
    $region11: #{agent_forward.1} parent=1 // pred_check_branch
      %32 = sbr.rel (0) target = $region13
    $region12: #{agent_forward.1} parent=1 // pred_region
      %33 = dma.done [#allocation3], 128
    $region13: #{agent_forward.1} parent=1 // pred_fallthru
      _
    // Predicated region
    $region14: #{agent_forward.1} parent=1 // pred_check
      _
    $region15: #{agent_forward.1} parent=1 // pred_check_branch
      %35 = sbr.rel (0) target = $region17
    $region16: #{agent_forward.1} parent=1 // pred_region
      %36 = dma.done [#allocation5], 4480
    $region17: #{agent_forward.1} parent=1 // pred_fallthru
      _
    %v37 = vld [vmem:[#allocation2] sm:$0xff]
    %v38 = vld [vmem:[#allocation4] sm:$0xff]
    %v39 = vld [vmem:[#allocation4 + $0x8] sm:$0xff]
    %v40 = vld [vmem:[#allocation4 + $0x10] sm:$0xff]
    %v41 = vld [vmem:[#allocation4 + $0x18] sm:$0xff]
    %v42 = vld [vmem:[#allocation4 + $0x20] sm:$0xff]
    %v43 = vld [vmem:[#allocation4 + $0x28] sm:$0xff]
    %v44 = vld [vmem:[#allocation4 + $0x30] sm:$0xff]
    %v45 = vld [vmem:[#allocation4 + $0x38] sm:$0xff]
    %v46 = vld [vmem:[#allocation4 + $0x40] sm:$0xff]
    %v47 = vld [vmem:[#allocation4 + $0x48] sm:$0xff]
    %v48 = vld [vmem:[#allocation4 + $0x50] sm:$0xff]
    %v49 = vld [vmem:[#allocation4 + $0x58] sm:$0xff]
    %v50 = vld [vmem:[#allocation4 + $0x60] sm:$0xff]
    %v51 = vld [vmem:[#allocation4 + $0x68] sm:$0xff]
    %v52 = vld [vmem:[#allocation4 + $0x70] sm:$0xff]
    %v53 = vld [vmem:[#allocation4 + $0x78] sm:$0xff]
    %v54 = vld [vmem:[#allocation4 + $0x80] sm:$0xff]
    %v55 = vld [vmem:[#allocation4 + $0x88] sm:$0xff]
    %v56 = vld [vmem:[#allocation4 + $0x90] sm:$0xff]
    %v57 = vld [vmem:[#allocation4 + $0x98] sm:$0xff]
    %v58 = vld [vmem:[#allocation4 + $0xa0] sm:$0xff]
    %v59 = vld [vmem:[#allocation4 + $0xa8] sm:$0xff]
    %v60 = vld [vmem:[#allocation4 + $0xb0] sm:$0xff]
    %v61 = vld [vmem:[#allocation4 + $0xb8] sm:$0xff]
    %v62 = vld [vmem:[#allocation4 + $0xc0] sm:$0xff]
    %v63 = vld [vmem:[#allocation4 + $0xc8] sm:$0xff]
    %v64 = vld [vmem:[#allocation4 + $0xd0] sm:$0xff]
    %v65 = vld [vmem:[#allocation4 + $0xd8] sm:$0xff]
    %v66 = vld [vmem:[#allocation4 + $0xe0] sm:$0xff]
    %v67 = vld [vmem:[#allocation4 + $0xe8] sm:$0xff]
    %v68 = vld [vmem:[#allocation4 + $0xf0] sm:$0xff]
    %v69 = vld [vmem:[#allocation4 + $0xf8] sm:$0xff]
    %v70 = vld [vmem:[#allocation4 + $0x100] sm:$0xff]
    %v71 = vld [vmem:[#allocation4 + $0x108] sm:$0xff]
    %v72 = vld [vmem:[#allocation4 + $0x110] sm:$0x1]
    %v73 = vld [vmem:[#allocation4 + $0x111] sm:$0x1]
    %v74 = vld [vmem:[#allocation4 + $0x112] sm:$0x1]
    %v75 = vlaneseq
    %v76 = vshrl.u32 %v75, 7
    %v77 = vsub.s32 0, %v76
    %v78 = vrot.slane %v72, %v77
    %vm79 = vcmask 130048
    %v81 = vsel %vm79, %v37, 0
    %83 = vmatprep.subr.mxu0 0.0
    %84 = vmatpush1.msra.mxu0 %v38
    %85 = vmatprep.subr.mxu0 0.0
    %86 = vmatpush1.msra.mxu0 %v39
    %87 = vmatprep.subr.mxu0 0.0
    %88 = vmatpush1.msra.mxu0 0.0
    %89 = vmatprep.subr.mxu0 0.0
    %90 = vmatpush1.msra.mxu0 0.0
    %91 = vmatprep.subr.mxu0 0.0
    %92 = vmatpush1.msra.mxu0 0.0
    %93 = vmatprep.subr.mxu0 0.0
    %94 = vmatpush1.msra.mxu0 0.0
    %95 = vmatprep.subr.mxu0 0.0
    %96 = vmatpush1.msra.mxu0 0.0
    %97 = vmatprep.subr.mxu0 0.0
    %98 = vmatpush1.msra.mxu0 0.0
    %99 = vmatprep.subr.mxu0 0.0
    %100 = vmatpush1.msra.mxu0 0.0
    %101 = vmatprep.subr.mxu0 0.0
    %102 = vmatpush1.msra.mxu0 0.0
    %103 = vmatprep.subr.mxu0 0.0
    %104 = vmatpush1.msra.mxu0 0.0
    %105 = vmatprep.subr.mxu0 0.0
    %106 = vmatpush1.msra.mxu0 0.0
    %107 = vmatprep.subr.mxu0 0.0
    %108 = vmatpush1.msra.mxu0 0.0
    %109 = vmatprep.subr.mxu0 0.0
    %110 = vmatpush1.msra.mxu0 0.0
    %111 = vmatprep.subr.mxu0 0.0
    %112 = vmatpush1.msra.mxu0 0.0
    %113 = vmatprep.subr.mxu0 0.0
    %114 = vmatpush1.msra.mxu0 0.0
    %115 = vmatprep.subr.mxu0 0.0
    %116 = vmatpush1.msra.mxu0 0.0
    %117 = vmatprep.subr.mxu0 0.0
    %118 = vmatpush1.msra.mxu0 0.0
    %119 = vmatprep.subr.mxu0 0.0
    %120 = vmatpush1.msra.mxu0 0.0
    %121 = vmatprep.subr.mxu0 0.0
    %122 = vmatpush1.msra.mxu0 0.0
    %123 = vmatprep.subr.mxu0 0.0
    %124 = vmatpush1.msra.mxu0 0.0
    %125 = vmatprep.subr.mxu0 0.0
    %126 = vmatpush1.msra.mxu0 0.0
    %127 = vmatprep.subr.mxu0 0.0
    %128 = vmatpush1.msra.mxu0 0.0
    %129 = vmatprep.subr.mxu0 0.0
    %130 = vmatpush1.msra.mxu0 0.0
    %131 = vmatprep.subr.mxu0 0.0
    %132 = vmatpush1.msra.mxu0 0.0
    %133 = vmatprep.subr.mxu0 0.0
    %134 = vmatpush1.msra.mxu0 0.0
    %135 = vmatprep.subr.mxu0 0.0
    %136 = vmatpush1.msra.mxu0 0.0
    %137 = vmatprep.subr.mxu0 0.0
    %138 = vmatpush1.msra.mxu0 0.0
    %139 = vmatprep.subr.mxu0 0.0
    %140 = vmatpush1.msra.mxu0 0.0
    %141 = vmatprep.subr.mxu0 0.0
    %142 = vmatpush1.msra.mxu0 0.0
    %143 = vmatprep.subr.mxu0 0.0
    %144 = vmatpush1.msra.mxu0 0.0
    %145 = vmatprep.subr.mxu0 0.0
    %146 = vmatpush1.msra.mxu0 0.0
    %147 = vmatprep.mubr.f32.mxu0 0.0
    %148 = vmatmul.mubr.f32.gmra.mrb[0].mxu0 %v81
    %v149 = vpop.f32.mrb[0].mxu0
    %v150 = vadd.f32 %v78, %v149
    %v151 = vpop.f32.mrb[0].mxu0
    %152 = vdwg.mxu0
    %v153 = vtanh.pop %v150
    %v154 = vlaneseq
    %v155 = vshrl.u32 %v154, 7
    %v156 = vsub.s32 0, %v155
    %v157 = vrot.slane %v73, %v156
    %158 = vmatprep.subr.mxu0 0.0
    %159 = vmatpush1.msra.mxu0 %v40
    %160 = vmatprep.subr.mxu0 0.0
    %161 = vmatpush1.msra.mxu0 %v41
    %162 = vmatprep.subr.mxu0 0.0
    %163 = vmatpush1.msra.mxu0 %v42
    %164 = vmatprep.subr.mxu0 0.0
    %165 = vmatpush1.msra.mxu0 %v43
    %166 = vmatprep.subr.mxu0 0.0
    %167 = vmatpush1.msra.mxu0 %v44
    %168 = vmatprep.subr.mxu0 0.0
    %169 = vmatpush1.msra.mxu0 %v45
    %170 = vmatprep.subr.mxu0 0.0
    %171 = vmatpush1.msra.mxu0 %v46
    %172 = vmatprep.subr.mxu0 0.0
    %173 = vmatpush1.msra.mxu0 %v47
    %174 = vmatprep.subr.mxu0 0.0
    %175 = vmatpush1.msra.mxu0 %v48
    %176 = vmatprep.subr.mxu0 0.0
    %177 = vmatpush1.msra.mxu0 %v49
    %178 = vmatprep.subr.mxu0 0.0
    %179 = vmatpush1.msra.mxu0 %v50
    %180 = vmatprep.subr.mxu0 0.0
    %181 = vmatpush1.msra.mxu0 %v51
    %182 = vmatprep.subr.mxu0 0.0
    %183 = vmatpush1.msra.mxu0 %v52
    %184 = vmatprep.subr.mxu0 0.0
    %185 = vmatpush1.msra.mxu0 %v53
    %186 = vmatprep.subr.mxu0 0.0
    %187 = vmatpush1.msra.mxu0 %v54
    %188 = vmatprep.subr.mxu0 0.0
    %189 = vmatpush1.msra.mxu0 %v55
    %190 = vmatprep.subr.mxu0 0.0
    %191 = vmatpush1.msra.mxu0 0.0
    %192 = vmatprep.subr.mxu0 0.0
    %193 = vmatpush1.msra.mxu0 0.0
    %194 = vmatprep.subr.mxu0 0.0
    %195 = vmatpush1.msra.mxu0 0.0
    %196 = vmatprep.subr.mxu0 0.0
    %197 = vmatpush1.msra.mxu0 0.0
    %198 = vmatprep.subr.mxu0 0.0
    %199 = vmatpush1.msra.mxu0 0.0
    %200 = vmatprep.subr.mxu0 0.0
    %201 = vmatpush1.msra.mxu0 0.0
    %202 = vmatprep.subr.mxu0 0.0
    %203 = vmatpush1.msra.mxu0 0.0
    %204 = vmatprep.subr.mxu0 0.0
    %205 = vmatpush1.msra.mxu0 0.0
    %206 = vmatprep.subr.mxu0 0.0
    %207 = vmatpush1.msra.mxu0 0.0
    %208 = vmatprep.subr.mxu0 0.0
    %209 = vmatpush1.msra.mxu0 0.0
    %210 = vmatprep.subr.mxu0 0.0
    %211 = vmatpush1.msra.mxu0 0.0
    %212 = vmatprep.subr.mxu0 0.0
    %213 = vmatpush1.msra.mxu0 0.0
    %214 = vmatprep.subr.mxu0 0.0
    %215 = vmatpush1.msra.mxu0 0.0
    %216 = vmatprep.subr.mxu0 0.0
    %217 = vmatpush1.msra.mxu0 0.0
    %218 = vmatprep.subr.mxu0 0.0
    %219 = vmatpush1.msra.mxu0 0.0
    %220 = vmatprep.subr.mxu0 0.0
    %221 = vmatpush1.msra.mxu0 0.0
    %222 = vmatprep.mubr.f32.mxu0 0.0
    %223 = vmatmul.mubr.f32.gmra.mrb[0].mxu0 %v153
    %v224 = vpop.f32.mrb[0].mxu0
    %v225 = vadd.f32 %v157, %v224
    %v226 = vpop.f32.mrb[0].mxu0
    %227 = vdwg.mxu0
    %v228 = vtanh.pop %v225
    %v229 = vlaneseq
    %v230 = vshrl.u32 %v229, 7
    %v231 = vsub.s32 0, %v230
    %v232 = vrot.slane %v74, %v231
    %233 = vmatprep.subr.mxu0 0.0
    %234 = vmatpush1.msra.mxu0 %v56
    %235 = vmatprep.subr.mxu0 0.0
    %236 = vmatpush1.msra.mxu0 %v57
    %237 = vmatprep.subr.mxu0 0.0
    %238 = vmatpush1.msra.mxu0 %v58
    %239 = vmatprep.subr.mxu0 0.0
    %240 = vmatpush1.msra.mxu0 %v59
    %241 = vmatprep.subr.mxu0 0.0
    %242 = vmatpush1.msra.mxu0 %v60
    %243 = vmatprep.subr.mxu0 0.0
    %244 = vmatpush1.msra.mxu0 %v61
    %245 = vmatprep.subr.mxu0 0.0
    %246 = vmatpush1.msra.mxu0 %v62
    %247 = vmatprep.subr.mxu0 0.0
    %248 = vmatpush1.msra.mxu0 %v63
    %249 = vmatprep.subr.mxu0 0.0
    %250 = vmatpush1.msra.mxu0 %v64
    %251 = vmatprep.subr.mxu0 0.0
    %252 = vmatpush1.msra.mxu0 %v65
    %253 = vmatprep.subr.mxu0 0.0
    %254 = vmatpush1.msra.mxu0 %v66
    %255 = vmatprep.subr.mxu0 0.0
    %256 = vmatpush1.msra.mxu0 %v67
    %257 = vmatprep.subr.mxu0 0.0
    %258 = vmatpush1.msra.mxu0 %v68
    %259 = vmatprep.subr.mxu0 0.0
    %260 = vmatpush1.msra.mxu0 %v69
    %261 = vmatprep.subr.mxu0 0.0
    %262 = vmatpush1.msra.mxu0 %v70
    %263 = vmatprep.subr.mxu0 0.0
    %264 = vmatpush1.msra.mxu0 %v71
    %265 = vmatprep.subr.mxu0 0.0
    %266 = vmatpush1.msra.mxu0 0.0
    %267 = vmatprep.subr.mxu0 0.0
    %268 = vmatpush1.msra.mxu0 0.0
    %269 = vmatprep.subr.mxu0 0.0
    %270 = vmatpush1.msra.mxu0 0.0
    %271 = vmatprep.subr.mxu0 0.0
    %272 = vmatpush1.msra.mxu0 0.0
    %273 = vmatprep.subr.mxu0 0.0
    %274 = vmatpush1.msra.mxu0 0.0
    %275 = vmatprep.subr.mxu0 0.0
    %276 = vmatpush1.msra.mxu0 0.0
    %277 = vmatprep.subr.mxu0 0.0
    %278 = vmatpush1.msra.mxu0 0.0
    %279 = vmatprep.subr.mxu0 0.0
    %280 = vmatpush1.msra.mxu0 0.0
    %281 = vmatprep.subr.mxu0 0.0
    %282 = vmatpush1.msra.mxu0 0.0
    %283 = vmatprep.subr.mxu0 0.0
    %284 = vmatpush1.msra.mxu0 0.0
    %285 = vmatprep.subr.mxu0 0.0
    %286 = vmatpush1.msra.mxu0 0.0
    %287 = vmatprep.subr.mxu0 0.0
    %288 = vmatpush1.msra.mxu0 0.0
    %289 = vmatprep.subr.mxu0 0.0
    %290 = vmatpush1.msra.mxu0 0.0
    %291 = vmatprep.subr.mxu0 0.0
    %292 = vmatpush1.msra.mxu0 0.0
    %293 = vmatprep.subr.mxu0 0.0
    %294 = vmatpush1.msra.mxu0 0.0
    %295 = vmatprep.subr.mxu0 0.0
    %296 = vmatpush1.msra.mxu0 0.0
    %297 = vmatprep.mubr.f32.mxu0 0.0
    %298 = vmatmul.mubr.f32.gmra.mrb[0].mxu0 %v228
    %v299 = vpop.f32.mrb[0].mxu0
    %v300 = vadd.f32 %v232, %v299
    %v301 = vpop.f32.mrb[0].mxu0
    %302 = vdwg.mxu0
    %v303 = vlaneseq
    %v304 = vand.u32 %v303, 127
    %vm305 = vcmp.lt.s32.totalorder %v304, 6
    %v306 = vsel %vm305, %v300, -inf
    %307 = vmax.xlane.f32.xlu0 %v306
    %v308 = vpop.xlane.xlu0 %307
    %v309 = vsub.f32 %v300, %v308
    %v310 = vmul.f32 %v309, 1.442695
    %v311 = vpow.pop %v310
    %v312 = vsel %vm305, %v311, 0.0
    %313 = vadd.xlane.f32.xlu0 %v312
    %v314 = vpop.xlane.xlu0 %313
    %v315 = vlog2.pop %v314
    %v316 = vmul.f32 %v315, 0.6931472
    %v317 = vsub.f32 %v309, %v316
    %318 = vst [vmem:[%s2] sm:$0xff] %v300
    %319 = vst [vmem:[%s2 + $0x8] sm:$0xff] %v317
    // Predicated region
    $region18: #{agent_forward.1} parent=1 // pred_check
      _
    $region19: #{agent_forward.1} parent=1 // pred_check_branch
      %321 = sbr.rel (0) target = $region21
    $region20: #{agent_forward.1} parent=1 // pred_region
      _
    $region21: #{agent_forward.1} parent=1 // pred_fallthru
      _
    // Predicated region
    $region22: #{agent_forward.1} parent=1 // pred_check
      _
    $region23: #{agent_forward.1} parent=1 // pred_check_branch
      %323 = sbr.rel (0) target = $region25
    $region24: #{agent_forward.1} parent=1 // pred_region
      _
    $region25: #{agent_forward.1} parent=1 // pred_fallthru
      _
    %324 = vsyncpa [#allocation3], 1
    %325 = vsyncpa [#allocation5], 1

</llo_original>
